<compile_context>
chip_gen: v5e
topology: v5e:2x2
jax: 0.10.0
libtpu: 0.0.40
codegen_flags: <defaults>
</compile_context>

<pallas_src>
import functools

import jax
import jax.numpy as jnp
from jax.experimental import pallas as pl
from jax.experimental.pallas import tpu as pltpu


# ----------------------------- sizing helpers --------------------------------

def _sublane_unit(dtype):
    """Channel-tile granularity matching vreg sublane packing for this dtype."""
    return {4: 8, 2: 16, 1: 32}.get(jnp.dtype(dtype).itemsize, 8)


def _vmem_capacity_bytes():
    try:
        return int(pltpu.get_tpu_info().vmem_capacity_bytes)
    except Exception:
        return 64 << 20  # conservative: v7x per-TensorCore VMEM


def _vmem_limit(need, cap):
    """Explicit scoped-VMEM limit: never below the 32 MiB default, never above
    ~90% of physical capacity."""
    return int(min(max(int(need), 32 << 20), int(0.9 * cap)))


def _largest_divisor_tile(dim, unit, max_tile):
    """Largest divisor of `dim` that is a multiple of `unit` and <= max_tile."""
    cand = (min(max_tile, dim) // unit) * unit
    while cand >= unit:
        if dim % cand == 0:
            return cand
        cand -= unit
    return None


def _pick_channel_tile(C, unit, max_tile):
    """Channel tile for the streaming path; prefers >=2 tiles (v7x megacore)."""
    if C % unit != 0:
        return C  # single full-extent channel tile (always legal)
    t = _largest_divisor_tile(C, unit, max_tile)
    if t is not None and C // t == 1 and C >= 2 * unit:
        t2 = _largest_divisor_tile(C, unit, C // 2)
        if t2 is not None:
            return t2
    return t if t is not None else C


def _pick_hw_tile(HW_pad, c_tile, itemsize, block_bytes):
    """Lane-dense HW tile: multiple of 128, divides HW_pad, block <= block_bytes."""
    max_lanes = max(128, (block_bytes // max(1, c_tile * itemsize)) // 128 * 128)
    t = _largest_divisor_tile(HW_pad, 128, max_lanes)
    return t if t is not None else HW_pad


def _fused_vmem_need(N, c_tile, HW_pad, itemsize):
    slab_native = N * c_tile * HW_pad * itemsize
    slab_f32 = N * c_tile * HW_pad * 4
    small = 4 * N * c_tile * 4  # gamma/beta blocks, double-buffered
    # 2x in + 2x out double-buffering + f32 temporaries + margin.
    return 4 * slab_native + 2 * slab_f32 + small + (2 << 20)


# --------------------------------- kernels -----------------------------------

def _hyper_bn_fused_kernel(x_ref, gamma1_ref, beta_ref, o_ref, *, eps, inv_count):
    """Fused single pass over a resident (N, c_tile, HW) channel slab:
    batch statistics + conditional affine in one kernel (2x HBM traffic)."""
    x = x_ref[...].astype(jnp.float32)                      # (N, c_tile, HW)
    # One-pass sum / sum-of-squares (zero padding along HW contributes nothing;
    # inv_count uses the true element count).
    s = jnp.sum(x, axis=2, keepdims=True)                   # (N, c_tile, 1)
    sq = jnp.sum(x * x, axis=2, keepdims=True)              # (N, c_tile, 1)
    s = jnp.sum(s, axis=0, keepdims=True)                   # (1, c_tile, 1)
    sq = jnp.sum(sq, axis=0, keepdims=True)                 # (1, c_tile, 1)
    mean = s * inv_count
    var = jnp.maximum(sq * inv_count - mean * mean, 0.0)    # biased variance
    inv_std = jax.lax.rsqrt(var + eps)                      # EUP; c_tile total
    scale = gamma1_ref[...] * inv_std                       # (N, c_tile, 1)
    shift = beta_ref[...] - scale * mean                    # (N, c_tile, 1)
    # Re-read x from the VMEM-resident block so the large f32 temporary above
    # is dead before the apply; the cast fuses into the FMA + store.
    o_ref[...] = (scale * x_ref[...].astype(jnp.float32) + shift).astype(o_ref.dtype)


def _bn_stats_kernel(x_ref, mean_ref, inv_std_ref, *, eps, inv_count):
    """Fallback phase 1: accumulate per-channel sum / sum_sq directly into the
    resident output blocks; finalize mean & inv_std on the last reduction step."""
    n = pl.program_id(1)
    hi = pl.program_id(2)

    @pl.when(jnp.logical_and(n == 0, hi == 0))
    def _():
        mean_ref[...] = jnp.zeros_like(mean_ref)
        inv_std_ref[...] = jnp.zeros_like(inv_std_ref)

    # (c_tile, hw_tile) block; per-tile upcast (v5e VPU has no bf16 arithmetic).
    x = x_ref[...].astype(jnp.float32)
    mean_ref[...] += jnp.sum(x, axis=1, keepdims=True)        # running sum
    inv_std_ref[...] += jnp.sum(x * x, axis=1, keepdims=True)  # running sum_sq

    @pl.when(jnp.logical_and(n == pl.num_programs(1) - 1,
                             hi == pl.num_programs(2) - 1))
    def _():
        mean = mean_ref[...] * inv_count
        var = jnp.maximum(inv_std_ref[...] * inv_count - mean * mean, 0.0)
        mean_ref[...] = mean
        inv_std_ref[...] = jax.lax.rsqrt(var + eps)            # C total


def _bn_apply_kernel(x_ref, scale_ref, shift_ref, o_ref):
    """Fallback phase 2: out = scale * x + shift (one FMA per element)."""
    x = x_ref[...].astype(jnp.float32)                         # (c_tile, hw_tile)
    o_ref[...] = (scale_ref[...] * x + shift_ref[...]).astype(o_ref.dtype)


# -------------------------------- wrapper -------------------------------------

def hyper_bn_2d(x, condition, w_gamma_sn, w_beta_sn, *, eps=1e-4,
                block_bytes=4 << 20, max_c_tile=256, force_two_phase=False):
    """x: (N, C, H, W); condition: (N, L); weights: (C, L) spectrally normalized."""
    N, C, H, W = x.shape
    HW = H * W
    itemsize = jnp.dtype(x.dtype).itemsize
    unit = _sublane_unit(x.dtype)
    cap = _vmem_capacity_bytes()
    budget = int(0.75 * cap)

    # Pad HW to a lane multiple (exact for zero-padded one-pass sum/sumsq with a
    # true-count normalizer); avoids oversized full-extent blocks for odd sizes.
    HW_pad = ((HW + 127) // 128) * 128
    x_flat = x.reshape(N, C, HW)                 # native dtype; no f32 HBM copy
    if HW_pad != HW:
        x_flat = jnp.pad(x_flat, ((0, 0), (0, 0), (0, HW_pad - HW)))

    # Tiny conditional-affine matmuls: plain JAX (K = latent_dim is too small
    # for the MXU); fold the "+1" into gamma here.
    cond = condition.astype(jnp.float32)
    gamma1 = cond @ w_gamma_sn.T.astype(jnp.float32) + 1.0     # (N, C)
    beta = cond @ w_beta_sn.T.astype(jnp.float32)              # (N, C)

    inv_count = 1.0 / float(N * HW)              # true count (excludes padding)

    # -------------------- fused single-pass path (preferred) -----------------
    c_tile_fused = None
    if not force_two_phase:
        if C % unit == 0:
            cands = [d for d in range(unit, C + 1, unit) if C % d == 0]
        else:
            cands = [C]                           # single full-extent channel tile
        fitting = [c for c in cands
                   if _fused_vmem_need(N, c, HW_pad, itemsize) <= budget]
        if fitting:
            multi = [c for c in fitting if C // c >= 2]   # >=2 tiles: v7x megacore
            c_tile_fused = max(multi) if multi else max(fitting)

    if c_tile_fused is not None:
        c_tile = c_tile_fused
        n_c_tiles = C // c_tile
        fused_cost = pl.CostEstimate(
            flops=5 * N * C * HW_pad,
            transcendentals=C,
            bytes_accessed=2 * N * C * HW_pad * itemsize + 2 * N * C * 4,
        )
        out_flat = pl.pallas_call(
            functools.partial(_hyper_bn_fused_kernel, eps=eps, inv_count=inv_count),
            out_shape=jax.ShapeDtypeStruct((N, C, HW_pad), x_flat.dtype),
            grid=(n_c_tiles,),
            in_specs=[
                pl.BlockSpec((N, c_tile, HW_pad), lambda ci: (0, ci, 0)),
                pl.BlockSpec((N, c_tile, 1), lambda ci: (0, ci, 0)),
                pl.BlockSpec((N, c_tile, 1), lambda ci: (0, ci, 0)),
            ],
            out_specs=pl.BlockSpec((N, c_tile, HW_pad), lambda ci: (0, ci, 0)),
            compiler_params=pltpu.CompilerParams(
                dimension_semantics=("parallel",),
                vmem_limit_bytes=_vmem_limit(
                    _fused_vmem_need(N, c_tile, HW_pad, itemsize), cap)),
            cost_estimate=fused_cost,
        )(x_flat, gamma1[:, :, None], beta[:, :, None])
        return out_flat[:, :, :HW].reshape(N, C, H, W)

    # ------------------------ two-phase streaming fallback -------------------
    c_tile = _pick_channel_tile(C, unit, max_c_tile)
    hw_tile = _pick_hw_tile(HW_pad, c_tile, itemsize, block_bytes)
    n_c_tiles = C // c_tile
    n_hw_tiles = HW_pad // hw_tile

    block_native = c_tile * hw_tile * itemsize
    block_f32 = c_tile * hw_tile * 4
    col_bytes = c_tile * 4
    stats_need = 2 * block_native + 3 * block_f32 + 4 * col_bytes + (2 << 20)
    apply_need = 4 * block_native + 2 * block_f32 + 8 * col_bytes + (2 << 20)

    # Phase 1: per-channel batch statistics (reduction axes last, "arbitrary").
    stats_cost = pl.CostEstimate(
        flops=3 * N * C * HW_pad,
        transcendentals=C,
        bytes_accessed=N * C * HW_pad * itemsize + 2 * C * 4,
    )
    mean, inv_std = pl.pallas_call(
        functools.partial(_bn_stats_kernel, eps=eps, inv_count=inv_count),
        out_shape=(jax.ShapeDtypeStruct((C, 1), jnp.float32),
                   jax.ShapeDtypeStruct((C, 1), jnp.float32)),
        grid=(n_c_tiles, N, n_hw_tiles),
        in_specs=[
            pl.BlockSpec((pl.Squeezed(), c_tile, hw_tile),
                         lambda ci, n, hi: (n, ci, hi)),
        ],
        out_specs=(
            pl.BlockSpec((c_tile, 1), lambda ci, n, hi: (ci, 0)),
            pl.BlockSpec((c_tile, 1), lambda ci, n, hi: (ci, 0)),
        ),
        compiler_params=pltpu.CompilerParams(
            dimension_semantics=("parallel", "arbitrary", "arbitrary"),
            vmem_limit_bytes=_vmem_limit(stats_need, cap)),
        cost_estimate=stats_cost,
    )(x_flat)

    # Fold BN normalization + conditional affine into one per-(n,c) scale/shift:
    #   out = gamma1 * (x - mean) * inv_std + beta = scale * x + shift
    scale = gamma1 * inv_std[:, 0][None, :]                   # (N, C) f32
    shift = beta - scale * mean[:, 0][None, :]                # (N, C) f32

    # Phase 2: streaming apply pass.
    apply_cost = pl.CostEstimate(
        flops=2 * N * C * HW_pad,
        transcendentals=0,
        bytes_accessed=2 * N * C * HW_pad * itemsize + 2 * N * C * 4,
    )
    out_flat = pl.pallas_call(
        _bn_apply_kernel,
        out_shape=jax.ShapeDtypeStruct((N, C, HW_pad), x_flat.dtype),
        grid=(N, n_c_tiles, n_hw_tiles),
        in_specs=[
            pl.BlockSpec((pl.Squeezed(), c_tile, hw_tile),
                         lambda n, ci, hi: (n, ci, hi)),
            pl.BlockSpec((pl.Squeezed(), c_tile, 1),
                         lambda n, ci, hi: (n, ci, 0)),
            pl.BlockSpec((pl.Squeezed(), c_tile, 1),
                         lambda n, ci, hi: (n, ci, 0)),
        ],
        out_specs=pl.BlockSpec((pl.Squeezed(), c_tile, hw_tile),
                               lambda n, ci, hi: (n, ci, hi)),
        compiler_params=pltpu.CompilerParams(
            dimension_semantics=("parallel", "parallel", "parallel"),
            vmem_limit_bytes=_vmem_limit(apply_need, cap)),
        cost_estimate=apply_cost,
    )(x_flat, scale[:, :, None], shift[:, :, None])

    return out_flat[:, :, :HW].reshape(N, C, H, W)


# ------------------------ parameter setup & reference -------------------------

def spectral_normalize(w, key, *, eps=1e-4, n_power_iterations=1):
    """Spectral norm of a Linear weight w: (out_features, in_features)."""
    # TODO(synk): torch.nn.utils.spectral_norm persists `u` across forward calls;
    # here a fresh u is drawn (stateless parameter-setup glue, not a kernel issue).
    out_f, _ = w.shape
    u = jax.random.normal(key, (out_f,), dtype=jnp.float32)
    u = u / (jnp.linalg.norm(u) + eps)
    v = None
    for _ in range(n_power_iterations):
        v = w.T @ u
        v = v / (jnp.linalg.norm(v) + eps)
        u = w @ v
        u = u / (jnp.linalg.norm(u) + eps)
    sigma = u @ (w @ v)
    return w / sigma


def reference_hyper_bn_2d(x, condition, w_gamma_sn, w_beta_sn, *, eps=1e-4):
    """Pure-JAX reference mirroring F.batch_norm(training=True) semantics."""
    gamma = condition @ w_gamma_sn.T  # (N, C)
    beta = condition @ w_beta_sn.T    # (N, C)
    mean = jnp.mean(x, axis=(0, 2, 3), keepdims=True)
    var = jnp.mean((x - mean) ** 2, axis=(0, 2, 3), keepdims=True)  # biased
    x_hat = (x - mean) / jnp.sqrt(var + eps)
    return (gamma[:, :, None, None] + 1.0) * x_hat + beta[:, :, None, None]


if __name__ == "__main__":
    eps = 1e-4

    def check(N, C, H, W, L, *, force_two_phase, seed):
        key = jax.random.PRNGKey(seed)
        kx, kc, kwg, kwb, kug, kub = jax.random.split(key, 6)
        x = jax.random.normal(kx, (N, C, H, W), dtype=jnp.float32)
        condition = jax.random.normal(kc, (N, L), dtype=jnp.float32)
        bound = 1.0 / float(L) ** 0.5
        w_gamma = jax.random.uniform(kwg, (C, L), minval=-bound, maxval=bound,
                                     dtype=jnp.float32)
        w_beta = jax.random.uniform(kwb, (C, L), minval=-bound, maxval=bound,
                                    dtype=jnp.float32)
        w_gamma_sn = spectral_normalize(w_gamma, kug, eps=eps)
        w_beta_sn = spectral_normalize(w_beta, kub, eps=eps)

        out = hyper_bn_2d(x, condition, w_gamma_sn, w_beta_sn, eps=eps,
                          force_two_phase=force_two_phase)
        out = jax.block_until_ready(out)
        ref = reference_hyper_bn_2d(x, condition, w_gamma_sn, w_beta_sn, eps=eps)
        assert out.shape == (N, C, H, W)
        assert jnp.allclose(out, ref, rtol=1e-4, atol=5e-5), (
            f"mismatch N={N} C={C} H={H} W={W} two_phase={force_two_phase}")

    # Primary case from the module shapes: N=2, C=num_features=4, H=W=16, L=8.
    check(2, 4, 16, 16, 8, force_two_phase=False, seed=0)   # fused single-pass path
    check(2, 4, 16, 16, 8, force_two_phase=True, seed=0)    # two-phase fallback path
    # Non-128-divisible spatial size exercises the HW zero-padding path.
    check(2, 8, 10, 10, 8, force_two_phase=False, seed=1)
    check(2, 8, 10, 10, 8, force_two_phase=True, seed=1)

    # TODO(synk): eval-mode path (standing-stat interpolation by truncation) and
    # running-stat buffer updates are stateful/bookkeeping and not implemented.
    print("KERNEL_OK")
</pallas_src>

<mosaic_0001>
module attributes {stable_mosaic.version = 11 : i64} {
  func.func @_hyper_bn_fused_kernel(%arg0: i32, %arg1: memref<2x4x256xf32, #tpu.memory_space<vmem>>, %arg2: memref<2x4x1xf32, #tpu.memory_space<vmem>>, %arg3: memref<2x4x1xf32, #tpu.memory_space<vmem>>, %arg4: memref<2x4x256xf32, #tpu.memory_space<vmem>>) attributes {dimension_semantics = [#tpu.dimension_semantics<parallel>], iteration_bounds = array<i64: 1>, scalar_prefetch = 0 : i64, scratch_operands = 0 : i64, tpu.core_type = #tpu.core_type<tc>, window_params = [{transform_indices = @transform_0, window_bounds = array<i64: 2, 4, 256>}, {transform_indices = @transform_1, window_bounds = array<i64: 2, 4, 1>}, {transform_indices = @transform_2, window_bounds = array<i64: 2, 4, 1>}, {transform_indices = @transform_3, window_bounds = array<i64: 2, 4, 256>}]} {
    %c0 = arith.constant 0 : index
    %c0_0 = arith.constant 0 : index
    %c0_1 = arith.constant 0 : index
    %0 = vector.load %arg1[%c0, %c0_0, %c0_1] : memref<2x4x256xf32, #tpu.memory_space<vmem>>, vector<2x4x256xf32>
    %cst = arith.constant dense<0.000000e+00> : vector<2x4xf32>
    %1 = vector.multi_reduction <add>, %0, %cst [2] : vector<2x4x256xf32> to vector<2x4xf32>
    %2 = vector.shape_cast %1 : vector<2x4xf32> to vector<2x4x1xf32>
    %3 = arith.mulf %0, %0 : vector<2x4x256xf32>
    %cst_2 = arith.constant dense<0.000000e+00> : vector<2x4xf32>
    %4 = vector.multi_reduction <add>, %3, %cst_2 [2] : vector<2x4x256xf32> to vector<2x4xf32>
    %5 = vector.shape_cast %4 : vector<2x4xf32> to vector<2x4x1xf32>
    %cst_3 = arith.constant dense<0.000000e+00> : vector<4x1xf32>
    %6 = vector.multi_reduction <add>, %2, %cst_3 [0] : vector<2x4x1xf32> to vector<4x1xf32>
    %7 = vector.shape_cast %6 : vector<4x1xf32> to vector<1x4x1xf32>
    %cst_4 = arith.constant dense<0.000000e+00> : vector<4x1xf32>
    %8 = vector.multi_reduction <add>, %5, %cst_4 [0] : vector<2x4x1xf32> to vector<4x1xf32>
    %9 = vector.shape_cast %8 : vector<4x1xf32> to vector<1x4x1xf32>
    %cst_5 = arith.constant 0.001953125 : f32
    %10 = vector.broadcast %cst_5 : f32 to vector<1x4x1xf32>
    %11 = arith.mulf %7, %10 : vector<1x4x1xf32>
    %cst_6 = arith.constant 0.001953125 : f32
    %12 = vector.broadcast %cst_6 : f32 to vector<1x4x1xf32>
    %13 = arith.mulf %9, %12 : vector<1x4x1xf32>
    %14 = arith.mulf %11, %11 : vector<1x4x1xf32>
    %15 = arith.subf %13, %14 : vector<1x4x1xf32>
    %cst_7 = arith.constant 0.000000e+00 : f32
    %16 = vector.broadcast %cst_7 : f32 to vector<1x4x1xf32>
    %17 = arith.maximumf %15, %16 : vector<1x4x1xf32>
    %cst_8 = arith.constant 9.99999974E-5 : f32
    %18 = vector.broadcast %cst_8 : f32 to vector<1x4x1xf32>
    %19 = arith.addf %17, %18 : vector<1x4x1xf32>
    %20 = math.rsqrt %19 : vector<1x4x1xf32>
    %c0_9 = arith.constant 0 : index
    %c0_10 = arith.constant 0 : index
    %c0_11 = arith.constant 0 : index
    %21 = vector.load %arg2[%c0_9, %c0_10, %c0_11] : memref<2x4x1xf32, #tpu.memory_space<vmem>>, vector<2x4x1xf32>
    %22 = vector.broadcast %20 : vector<1x4x1xf32> to vector<2x4x1xf32>
    %23 = arith.mulf %21, %22 : vector<2x4x1xf32>
    %c0_12 = arith.constant 0 : index
    %c0_13 = arith.constant 0 : index
    %c0_14 = arith.constant 0 : index
    %24 = vector.load %arg3[%c0_12, %c0_13, %c0_14] : memref<2x4x1xf32, #tpu.memory_space<vmem>>, vector<2x4x1xf32>
    %25 = vector.broadcast %11 : vector<1x4x1xf32> to vector<2x4x1xf32>
    %26 = arith.mulf %23, %25 : vector<2x4x1xf32>
    %27 = arith.subf %24, %26 : vector<2x4x1xf32>
    %c0_15 = arith.constant 0 : index
    %c0_16 = arith.constant 0 : index
    %c0_17 = arith.constant 0 : index
    %28 = vector.load %arg1[%c0_15, %c0_16, %c0_17] : memref<2x4x256xf32, #tpu.memory_space<vmem>>, vector<2x4x256xf32>
    %29 = vector.broadcast %23 : vector<2x4x1xf32> to vector<2x4x256xf32>
    %30 = arith.mulf %29, %28 : vector<2x4x256xf32>
    %31 = vector.broadcast %27 : vector<2x4x1xf32> to vector<2x4x256xf32>
    %32 = arith.addf %30, %31 : vector<2x4x256xf32>
    %c0_18 = arith.constant 0 : index
    %c0_19 = arith.constant 0 : index
    %c0_20 = arith.constant 0 : index
    %33 = vector.load %arg4[%c0_18, %c0_19, %c0_20] : memref<2x4x256xf32, #tpu.memory_space<vmem>>, vector<2x4x256xf32>
    tpu.vector_store %arg4[%c0_18, %c0_19, %c0_20], %32 {strides = array<i32>} : memref<2x4x256xf32, #tpu.memory_space<vmem>>, vector<2x4x256xf32>,
    return
  }
  func.func @transform_0(%arg0: i32) -> (i32, i32, i32) {
    %c0_i32 = arith.constant 0 : i32
    %c0_i32_0 = arith.constant 0 : i32
    %c0_i32_1 = arith.constant 0 : i32
    return %c0_i32, %arg0, %c0_i32_0 : i32, i32, i32
  }
  func.func @transform_1(%arg0: i32) -> (i32, i32, i32) {
    %c0_i32 = arith.constant 0 : i32
    %c0_i32_0 = arith.constant 0 : i32
    %c0_i32_1 = arith.constant 0 : i32
    return %c0_i32, %arg0, %c0_i32_0 : i32, i32, i32
  }
  func.func @transform_2(%arg0: i32) -> (i32, i32, i32) {
    %c0_i32 = arith.constant 0 : i32
    %c0_i32_0 = arith.constant 0 : i32
    %c0_i32_1 = arith.constant 0 : i32
    return %c0_i32, %arg0, %c0_i32_0 : i32, i32, i32
  }
  func.func @transform_3(%arg0: i32) -> (i32, i32, i32) {
    %c0_i32 = arith.constant 0 : i32
    %c0_i32_0 = arith.constant 0 : i32
    %c0_i32_1 = arith.constant 0 : i32
    return %c0_i32, %arg0, %c0_i32_0 : i32, i32, i32
  }
}

</mosaic_0001>

<llo_original>
// kernel: tpu_custom_call.1
$region0: #{tpu_custom_call.1}
  #allocation0 [shape = 'u32[]', space=smem, size = 0x4, offset = 0x4, fixed_abs, tag = 'smem constant byte address 0x4 - core index']
  #allocation1 [shape = 'u32[72,128]{1,0:T(1,128)}', space=vmem, size = 0x9000, scoped, tag = 'internal scratch']
  %s0 = inlined_call_operand.vmem [shape: f32[2,4,256], index: 0, kind: input, shape index: {}]
  %s1 = inlined_call_operand.vmem [shape: f32[2,4,1], index: 1, kind: input, shape index: {}]
  %s2 = inlined_call_operand.vmem [shape: f32[2,4,1], index: 2, kind: input, shape index: {}]
  %s3 = inlined_call_operand.hbm [shape: f32[2,4,256], index: 3, kind: output, shape index: {}]
  %s4 = sld [smem:[#allocation0]]
  $region22: #{tpu_custom_call.1} parent=0
    _
  %s6 = ssub.s32 1, %s4
  %s7 = scalar_select 0, %s6, %s4
  $region1: #{tpu_custom_call.1} parent=0
    #allocation2 [shape = 'u8[8192]{0}', space=vmem, size = 0x2000, scoped, tag = 'output window, operand 0, single buffered']
    #allocation3 [shape = 's32[1]{0}', space=sflag, size = 0x4, scoped, tag = 'scoped memory for tpu_custom_call.1']
    %8 = vsyncpa [#allocation3], 0
    // Predicated region
    $region2: #{tpu_custom_call.1} parent=1 // pred_check
      _
    $region3: #{tpu_custom_call.1} parent=1 // pred_check_branch
      %10 = sbr.rel (0) target = $region5
    $region4: #{tpu_custom_call.1} parent=1 // pred_region
      _
    $region5: #{tpu_custom_call.1} parent=1 // pred_fallthru
      _
    // Predicated region
    $region6: #{tpu_custom_call.1} parent=1 // pred_check
      _
    $region7: #{tpu_custom_call.1} parent=1 // pred_check_branch
      %12 = sbr.rel (0) target = $region9
    $region8: #{tpu_custom_call.1} parent=1 // pred_region
      _
    $region9: #{tpu_custom_call.1} parent=1 // pred_fallthru
      _
    // Predicated region
    $region10: #{tpu_custom_call.1} parent=1 // pred_check
      _
    $region11: #{tpu_custom_call.1} parent=1 // pred_check_branch
      %14 = sbr.rel (0) target = $region13
    $region12: #{tpu_custom_call.1} parent=1 // pred_region
      _
    $region13: #{tpu_custom_call.1} parent=1 // pred_fallthru
      _
    %v15 = vld [vmem:[%s0] sm:$0xff]
    %v16 = vld [vmem:[%s0 + $0x8] sm:$0xff]
    %19 = vst [vmem:[#allocation1] ss:$2 sm:$0xff] %v15
    %v20 = vld.sshfl [vmem:[#allocation1] sm:$0xff pattern:$0x75316420]
    %v21 = vld.sshfl [vmem:[#allocation1 + $0x8] sm:$0xff pattern:$0x75316420]
    %s22 = scalar_lea.vmem [#allocation1], 16
    %23 = vst [vmem:[%s22] ss:$2 sm:$0xff] %v16
    %v24 = vld.sshfl [vmem:[#allocation1 + $0x10] sm:$0xff pattern:$0x75316420]
    %v25 = vld.sshfl [vmem:[#allocation1 + $0x18] sm:$0xff pattern:$0x75316420]
    %vm30 = vcmask 1043456
    %v31 = vsel %vm30, %v20, 0.0
    %v32 = vsel %vm30, %v21, 0.0
    %v33 = vadd.f32 %v31, %v32
    %34 = vadd.xlane.f32.xlu0 %v33
    %v35 = vpop.xlane.xlu0 %34
    %v36 = vsel %vm30, %v24, 0.0
    %v37 = vsel %vm30, %v25, 0.0
    %v38 = vadd.f32 %v36, %v37
    %39 = vadd.xlane.f32.xlu0 %v38
    %v40 = vpop.xlane.xlu0 %39
    %v41 = vmul.f32 %v15, %v15
    %v42 = vmul.f32 %v16, %v16
    %45 = vst [vmem:[#allocation1] ss:$2 sm:$0xff] %v41
    %v46 = vld.sshfl [vmem:[#allocation1] sm:$0xff pattern:$0x75316420]
    %v47 = vld.sshfl [vmem:[#allocation1 + $0x8] sm:$0xff pattern:$0x75316420]
    %s48 = scalar_lea.vmem [#allocation1], 16
    %49 = vst [vmem:[%s48] ss:$2 sm:$0xff] %v42
    %v50 = vld.sshfl [vmem:[#allocation1 + $0x10] sm:$0xff pattern:$0x75316420]
    %v51 = vld.sshfl [vmem:[#allocation1 + $0x18] sm:$0xff pattern:$0x75316420]
    %v56 = vsel %vm30, %v46, 0.0
    %v57 = vsel %vm30, %v47, 0.0
    %v58 = vadd.f32 %v56, %v57
    %59 = vadd.xlane.f32.xlu0 %v58
    %v60 = vpop.xlane.xlu0 %59
    %v61 = vsel %vm30, %v50, 0.0
    %v62 = vsel %vm30, %v51, 0.0
    %v63 = vadd.f32 %v61, %v62
    %64 = vadd.xlane.f32.xlu0 %v63
    %v65 = vpop.xlane.xlu0 %64
    %v66 = vsel %vm30, %v35, 0.0
    %v67 = vsel %vm30, %v40, 0.0
    %v68 = vadd.f32 %v66, %v67
    %v69 = vsel %vm30, %v60, 0.0
    %v70 = vsel %vm30, %v65, 0.0
    %v71 = vadd.f32 %v69, %v70
    %v72 = vmul.f32 %v68, 0.001953125
    %v73 = vmul.f32 %v71, 0.001953125
    %v74 = vmul.f32 %v72, %v72
    %v75 = vsub.f32 %v73, %v74
    %v76 = vmax.f32 %v75, 0.0
    %v77 = vadd.f32 %v76, 0.0001
    %v78 = vrsqrt.pop %v77
    %v79 = vmul.f32 %v78, %v77
    %v80 = vmul.f32 %v79, %v78
    %v81 = vmul.f32 0.5, %v80
    %v82 = vsub.f32 1.5, %v81
    %v83 = vmul.f32 %v78, %v82
    %vm84 = vweird.f32 %v77
    %vm85 = vweird.f32 %v78
    %vm86 = vmor %vm84, %vm85
    %v87 = vsel %vm86, %v78, %v83
    %v88 = vld [vmem:[%s1] sm:$0xf]
    %v89 = vld [vmem:[%s1 + $0x4] sm:$0xf]
    %v90 = vmul.f32 %v88, %v87
    %v91 = vmul.f32 %v89, %v87
    %v92 = vld [vmem:[%s2] sm:$0xf]
    %v93 = vld [vmem:[%s2 + $0x4] sm:$0xf]
    %v94 = vmul.f32 %v90, %v72
    %v95 = vmul.f32 %v91, %v72
    %v96 = vsub.f32 %v92, %v94
    %v97 = vsub.f32 %v93, %v95
    %99 = vset.pattern.permute.xlu0 0
    %100 = vperm.xlu0 %99, %v90
    %v101 = vpop.permute.xlu0 %100
    %104 = vset.pattern.permute.xlu0 0
    %105 = vperm.xlu0 %104, %v91
    %v106 = vpop.permute.xlu0 %105
    %108 = vst [vmem:[#allocation1] ss:$2 sm:$0xff] %v15
    %v109 = vld.sshfl [vmem:[#allocation1] sm:$0xff pattern:$0x75316420]
    %v110 = vld.sshfl [vmem:[#allocation1 + $0x8] sm:$0xff pattern:$0x75316420]
    %s111 = scalar_lea.vmem [#allocation1], 16
    %112 = vst [vmem:[%s111] ss:$2 sm:$0xff] %v16
    %v113 = vld.sshfl [vmem:[#allocation1 + $0x10] sm:$0xff pattern:$0x75316420]
    %v114 = vld.sshfl [vmem:[#allocation1 + $0x18] sm:$0xff pattern:$0x75316420]
    %v119 = vmul.f32 %v101, %v109
    %v120 = vmul.f32 %v101, %v110
    %v121 = vmul.f32 %v106, %v113
    %v122 = vmul.f32 %v106, %v114
    %124 = vset.pattern.permute.xlu0 0
    %125 = vperm.xlu0 %124, %v96
    %v126 = vpop.permute.xlu0 %125
    %129 = vset.pattern.permute.xlu0 0
    %130 = vperm.xlu0 %129, %v97
    %v131 = vpop.permute.xlu0 %130
    %v133 = vadd.f32 %v119, %v126
    %v134 = vadd.f32 %v120, %v126
    %v135 = vadd.f32 %v121, %v131
    %v136 = vadd.f32 %v122, %v131
    %v141 = vrot.slane %v134, 4
    %v142 = vrot.slane %v136, 4
    %v143 = vsel %vm30, %v133, %v141
    %v144 = vsel %vm30, %v135, %v142
    %147 = vst [vmem:[#allocation2] sm:$0xff] %v143
    %148 = vst [vmem:[#allocation2 + $0x8] sm:$0xff] %v144
    // Predicated region
    $region14: #{tpu_custom_call.1} parent=1 // pred_check
      _
    $region15: #{tpu_custom_call.1} parent=1 // pred_check_branch
      %150 = sbr.rel (0) target = $region17
    $region16: #{tpu_custom_call.1} parent=1 // pred_region
      %152 = vsyncadd [#allocation3], 0
      %s153 = sshll.u32 [#allocation2], 4
      %s154 = int_to_ptr.vmem [resolvable:$true] %s153
      %s155 = sshll.u32 %s3, 4
      %s156 = int_to_ptr.hbm [resolvable:$true] %s155
      %161 = dma.vmem_to_hbm [thread:$0]  %s154, 256, %s156, [#allocation3], 128, 128, 8
    $region17: #{tpu_custom_call.1} parent=1 // pred_fallthru
      _
    // Predicated region
    $region18: #{tpu_custom_call.1} parent=1 // pred_check
      _
    $region19: #{tpu_custom_call.1} parent=1 // pred_check_branch
      %163 = sbr.rel (0) target = $region21
    $region20: #{tpu_custom_call.1} parent=1 // pred_region
      %165 = dma.done [#allocation3], 256
    $region21: #{tpu_custom_call.1} parent=1 // pred_fallthru
      _
    %166 = vsyncpa [#allocation3], 1

</llo_original>
